<compile_context>
chip_gen: v7x
topology: tpu7x:2x2x1
jax: 0.10.0
libtpu: 0.0.40
codegen_flags: <defaults>
</compile_context>

<pallas_src>
import functools
import math

import numpy as np
import jax
import jax.numpy as jnp
from jax.experimental import pallas as pl
from jax.experimental.pallas import tpu as pltpu

_BN_EPS = 1e-5
_TK_MAX = 2048          # max K tile of the dense matmul
_TN_MAX = 512           # max N tile of the dense matmul


def _round_up(x, m):
    return ((x + m - 1) // m) * m


# -----------------------------------------------------------------------------
# Generation-aware knobs (scoped-VMEM limit, grouped-conv lane width)
# -----------------------------------------------------------------------------
def _detect_vmem_capacity():
    try:
        cap = int(getattr(pltpu.get_tpu_info(), "vmem_capacity_bytes"))
        if cap > 0:
            return cap
    except Exception:
        pass
    try:
        kind = jax.devices()[0].device_kind.lower()
        if "v5" in kind or "v6" in kind:
            return 128 * 1024 * 1024
    except Exception:
        pass
    return 64 * 1024 * 1024                     # conservative (v7x-sized)


_VMEM_CAP = _detect_vmem_capacity()
_VMEM_LIMIT = (64 if _VMEM_CAP >= 100 * 1024 * 1024 else 40) * 1024 * 1024


def _detect_gconv_lanes():
    # 256-lane grouped-conv output packs fully drive a 256-wide MXU (v6e/v7x);
    # keep 128 on 128-wide MXUs (<= v5e).
    try:
        kind = jax.devices()[0].device_kind.lower()
        if any(v in kind for v in ("v2", "v3", "v4", "v5")):
            return 128
    except Exception:
        pass
    return 256


_GCONV_LANES = _detect_gconv_lanes()


def _pad_k(k):
    return _round_up(k, 128) if k <= _TK_MAX else _round_up(k, _TK_MAX)


def _pad_n(n):
    return _round_up(n, 128) if n <= _TN_MAX else _round_up(n, _TN_MAX)


# -----------------------------------------------------------------------------
# Canonical dense matmul kernel (bf16 operands, f32 accumulation), with
# optional (a) in-kernel per-channel affine+ReLU prologue on the A tile and
# (b) emitted per-tile channel sum / sum-of-squares (for BatchNorm stats).
# -----------------------------------------------------------------------------
def _mm_kernel_impl(*refs, has_prologue, has_stats):
    it = list(refs)
    a_ref = it.pop(0)
    if has_prologue:
        s_ref = it.pop(0)
        t_ref = it.pop(0)
    b_ref = it.pop(0)
    o_ref = it.pop(0)
    if has_stats:
        sum_ref = it.pop(0)
        sq_ref = it.pop(0)
    acc_ref = it.pop(0)

    @pl.when(pl.program_id(2) == 0)
    def _():
        acc_ref[...] = jnp.zeros_like(acc_ref)

    a = a_ref[...]
    if has_prologue:
        a = jnp.maximum(a.astype(jnp.float32) * s_ref[...] + t_ref[...], 0.0)
    a = a.astype(jnp.bfloat16)
    acc_ref[...] += jnp.dot(a, b_ref[...], preferred_element_type=jnp.float32)

    @pl.when(pl.program_id(2) == pl.num_programs(2) - 1)
    def _():
        acc = acc_ref[...]
        o_ref[...] = acc.astype(o_ref.dtype)
        if has_stats:
            cs = jnp.sum(acc, axis=0, keepdims=True)
            sum_ref[...] = jnp.broadcast_to(cs, sum_ref.shape)
            sq = jnp.sum(acc * acc, axis=0, keepdims=True)
            sq_ref[...] = jnp.broadcast_to(sq, sq_ref.shape)


@functools.lru_cache(maxsize=None)
def _build_matmul(Mp, Kp, Np, tm, tk, tn, has_prologue, has_stats):
    gm, gn, gk = Mp // tm, Np // tn, Kp // tk
    in_specs = [pl.BlockSpec((tm, tk), lambda i, j, k: (i, k))]
    if has_prologue:
        vec = pl.BlockSpec((1, tk), lambda i, j, k: (0, k))
        in_specs += [vec, vec]
    in_specs.append(pl.BlockSpec((tk, tn), lambda i, j, k: (k, j)))

    o_shape = jax.ShapeDtypeStruct((Mp, Np), jnp.bfloat16)
    o_spec = pl.BlockSpec((tm, tn), lambda i, j, k: (i, j))
    if has_stats:
        st_shape = jax.ShapeDtypeStruct((gm * 8, Np), jnp.float32)
        st_spec = pl.BlockSpec((8, tn), lambda i, j, k: (i, j))
        out_shape = (o_shape, st_shape, st_shape)
        out_specs = (o_spec, st_spec, st_spec)
    else:
        out_shape = o_shape
        out_specs = o_spec

    fn = pl.pallas_call(
        functools.partial(_mm_kernel_impl, has_prologue=has_prologue,
                          has_stats=has_stats),
        out_shape=out_shape,
        grid_spec=pltpu.PrefetchScalarGridSpec(
            num_scalar_prefetch=0,
            grid=(gm, gn, gk),
            in_specs=in_specs,
            out_specs=out_specs,
            scratch_shapes=[pltpu.VMEM((tm, tn), jnp.float32)]),
        compiler_params=pltpu.CompilerParams(
            dimension_semantics=("parallel", "parallel", "arbitrary"),
            vmem_limit_bytes=_VMEM_LIMIT),
    )
    return jax.jit(fn)


def _mm_tiles_m(M, Kp, Np):
    if M <= 256:
        Mp = _round_up(M, 16)        # bf16 sublane tile is 16
        tm = Mp
    else:
        tm = 256
        Mp = _round_up(M, tm)
    tk = Kp if Kp <= _TK_MAX else _TK_MAX
    tn = Np if Np <= _TN_MAX else _TN_MAX
    return Mp, tm, tk, tn


def pallas_matmul(a, wp, n_out, *, prologue=None, want_stats=False):
    """(M, K) @ pre-padded (Kp, Np) weight -> bf16 (M, n_out).

    prologue=(s, t): apply relu(a*s+t) per K-channel on the A tile in-kernel.
    want_stats: also return per-output-channel sum and sum-of-squares.
    """
    assert not (prologue is not None and want_stats)
    M, K = a.shape
    Kp, Np = wp.shape
    Mp, tm, tk, tn = _mm_tiles_m(M, Kp, Np)
    if a.dtype != jnp.bfloat16:
        a = a.astype(jnp.bfloat16)
    if Mp != M or Kp != K:
        a = jnp.pad(a, ((0, Mp - M), (0, Kp - K)))
    args = [a]
    if prologue is not None:
        s, t = prologue
        s = s.reshape(1, K).astype(jnp.float32)
        t = t.reshape(1, K).astype(jnp.float32)
        if Kp != K:
            s = jnp.pad(s, ((0, 0), (0, Kp - K)))
            t = jnp.pad(t, ((0, 0), (0, Kp - K)))
        args += [s, t]
    args.append(wp)
    fn = _build_matmul(Mp, Kp, Np, tm, tk, tn, prologue is not None, want_stats)
    res = fn(*args)
    if want_stats:
        y, sm, sq = res
        gm = Mp // tm
        sm = sm.reshape(gm, 8, Np)[:, 0, :].sum(axis=0)[:n_out]
        sq = sq.reshape(gm, 8, Np)[:, 0, :].sum(axis=0)[:n_out]
        return y[:M, :n_out], sm, sq
    return res[:M, :n_out]


# -----------------------------------------------------------------------------
# Grouped 3x3 conv: lane-dense packed-group kernel (with emitted BN stats)
#   A: (KK, Mp, C) bf16 patches; a pack = L contiguous channels selected purely
#      via the BlockSpec index_map.
#   W: (P, KK, L, L) bf16, block-diagonal within each pack (L = 128 or 256).
# Accumulator lives in a VMEM scratch (not vregs).
# -----------------------------------------------------------------------------
def _gconv_kernel(a_ref, w_ref, o_ref, sum_ref, sq_ref, acc_ref, *, kk_total):
    acc_ref[...] = jnp.zeros_like(acc_ref)
    for kk in range(kk_total):                       # unrolled 9 MXU dots
        acc_ref[...] += jnp.dot(a_ref[kk], w_ref[kk],
                                preferred_element_type=jnp.float32)
    acc = acc_ref[...]
    o_ref[...] = acc.astype(o_ref.dtype)
    cs = jnp.sum(acc, axis=0, keepdims=True)
    sum_ref[...] = jnp.broadcast_to(cs, sum_ref.shape)
    sq = jnp.sum(acc * acc, axis=0, keepdims=True)
    sq_ref[...] = jnp.broadcast_to(sq, sq_ref.shape)


@functools.lru_cache(maxsize=None)
def _build_gconv(KK, Mp, C, tm, L):
    P = C // L
    gm = Mp // tm
    out_shape = (jax.ShapeDtypeStruct((Mp, C), jnp.bfloat16),
                 jax.ShapeDtypeStruct((gm * 8, C), jnp.float32),
                 jax.ShapeDtypeStruct((gm * 8, C), jnp.float32))
    out_specs = (pl.BlockSpec((tm, L), lambda i, p: (i, p)),
                 pl.BlockSpec((8, L), lambda i, p: (i, p)),
                 pl.BlockSpec((8, L), lambda i, p: (i, p)))
    fn = pl.pallas_call(
        functools.partial(_gconv_kernel, kk_total=KK),
        out_shape=out_shape,
        grid_spec=pltpu.PrefetchScalarGridSpec(
            num_scalar_prefetch=0,
            grid=(gm, P),
            in_specs=[pl.BlockSpec((KK, tm, L), lambda i, p: (0, i, p)),
                      pl.BlockSpec((None, KK, L, L),
                                   lambda i, p: (p, 0, 0, 0))],
            out_specs=out_specs,
            scratch_shapes=[pltpu.VMEM((tm, L), jnp.float32)]),
        compiler_params=pltpu.CompilerParams(
            dimension_semantics=("parallel", "parallel"),
            vmem_limit_bytes=_VMEM_LIMIT),
    )
    return jax.jit(fn)


def _im2col_kfirst(x, kh, kw, stride, padding):
    # (N,H,W,C) -> (kh*kw, N*Ho*Wo, C); pack selection stays in the index_map.
    # TODO(synk): fold the overlapping-row patch extraction into the kernel via
    # manual DMA to avoid the 9x im2col materialization in HBM.
    N, H, W, C = x.shape
    if padding:
        x = jnp.pad(x, ((0, 0), (padding, padding), (padding, padding), (0, 0)))
    Ho = (H + 2 * padding - kh) // stride + 1
    Wo = (W + 2 * padding - kw) // stride + 1
    cols = [x[:, i:i + stride * Ho:stride, j:j + stride * Wo:stride, :]
            for i in range(kh) for j in range(kw)]
    p = jnp.stack(cols, axis=0)
    return p.reshape(kh * kw, N * Ho * Wo, C), (N, Ho, Wo)


def grouped_conv3x3(x, w_packed, stride, prologue):
    """Grouped 3x3 conv; bn+ReLU prologue applied to x before (zero) padding,
    returns (y_bf16, channel_sum, channel_sumsq, count) for bn2 stats."""
    s, t = prologue
    # TODO(synk): under a whole-model jit XLA fuses this affine into the im2col
    # producers; fully in-kernel fusion needs a padding mask on the A tiles.
    xf = jnp.maximum(x.astype(jnp.float32) * s + t, 0.0).astype(jnp.bfloat16)
    cols, (N, Ho, Wo) = _im2col_kfirst(xf, 3, 3, stride, 1)
    KK = w_packed.shape[1]
    L = w_packed.shape[2]
    M = N * Ho * Wo
    C = cols.shape[-1]
    if M <= 256:
        Mp = _round_up(M, 16)
        tm = Mp
    else:
        tm = 256
        Mp = _round_up(M, tm)
    if Mp != M:
        cols = jnp.pad(cols, ((0, 0), (0, Mp - M), (0, 0)))
    y, ssum, ssq = _build_gconv(KK, Mp, C, tm, L)(cols, w_packed)
    gm = Mp // tm
    ssum = ssum.reshape(gm, 8, C)[:, 0, :].sum(axis=0)
    ssq = ssq.reshape(gm, 8, C)[:, 0, :].sum(axis=0)
    return y[:M].reshape(N, Ho, Wo, C), ssum, ssq, M


# -----------------------------------------------------------------------------
# Fused bottleneck tail:
#   relu(out * scale[b,c] + shift[b,c] + residual * rs[c] + rt[c])
# (covers bn3*SE, the downsample-BN affine on the residual, residual add, ReLU)
# -----------------------------------------------------------------------------
def _tail_kernel(x_ref, s_ref, t_ref, r_ref, rs_ref, rt_ref, o_ref):
    y = x_ref[...].astype(jnp.float32) * s_ref[...] + t_ref[...]
    y = y + r_ref[...].astype(jnp.float32) * rs_ref[...] + rt_ref[...]
    o_ref[...] = jnp.maximum(y, 0.0).astype(o_ref.dtype)


@functools.lru_cache(maxsize=None)
def _build_tail(B, HWp, C, thw):
    act = pl.BlockSpec((1, thw, C), lambda b, h: (b, h, 0))
    vecb = pl.BlockSpec((1, 1, C), lambda b, h: (b, 0, 0))
    vec0 = pl.BlockSpec((1, 1, C), lambda b, h: (0, 0, 0))
    fn = pl.pallas_call(
        _tail_kernel,
        out_shape=jax.ShapeDtypeStruct((B, HWp, C), jnp.bfloat16),
        grid_spec=pltpu.PrefetchScalarGridSpec(
            num_scalar_prefetch=0,
            grid=(B, HWp // thw),
            in_specs=[act, vecb, vecb, act, vec0, vec0],
            out_specs=act),
        compiler_params=pltpu.CompilerParams(
            dimension_semantics=("parallel", "parallel"),
            vmem_limit_bytes=_VMEM_LIMIT),
    )
    return jax.jit(fn)


def fused_tail(x, scale, shift, residual, rs, rt):
    N, H, W, C = x.shape
    HW = H * W
    if HW * C <= (1 << 17):
        thw, HWp = HW, HW
    else:
        thw = max(16, ((1 << 17) // C) // 16 * 16)
        HWp = _round_up(HW, thw)

    def prep(a):
        a = a.reshape(N, HW, C)
        if HWp != HW:
            a = jnp.pad(a, ((0, 0), (0, HWp - HW), (0, 0)))
        return a.astype(jnp.bfloat16)

    out = _build_tail(N, HWp, C, thw)(
        prep(x),
        scale.reshape(N, 1, C).astype(jnp.float32),
        shift.reshape(N, 1, C).astype(jnp.float32),
        prep(residual),
        rs.reshape(1, 1, C).astype(jnp.float32),
        rt.reshape(1, 1, C).astype(jnp.float32))
    return out[:, :HW, :].reshape(N, H, W, C)


def _scale_shift_from_sums(total_sum, total_sumsq, count, gamma, beta):
    # training-mode BatchNorm2d: biased batch stats from kernel-emitted sums.
    mean = total_sum / count
    var = jnp.maximum(total_sumsq / count - mean * mean, 0.0)
    s = gamma * jax.lax.rsqrt(var + _BN_EPS)
    return s, beta - mean * s


# -----------------------------------------------------------------------------
# Fused SE squeeze-excite kernel:  sigmoid(fc2(relu(fc1(pooled))))
# -----------------------------------------------------------------------------
def _se_kernel(x_ref, w1_ref, b1_ref, w2_ref, b2_ref, o_ref):
    t = jnp.dot(x_ref[...].astype(jnp.bfloat16), w1_ref[...],
                preferred_element_type=jnp.float32) + b1_ref[...]
    t = jnp.maximum(t, 0.0)
    s = jnp.dot(t.astype(jnp.bfloat16), w2_ref[...],
                preferred_element_type=jnp.float32) + b2_ref[...]
    o_ref[...] = jax.nn.sigmoid(s)


@functools.lru_cache(maxsize=None)
def _build_se(Bp, C, H1p):
    vm = pl.BlockSpec(memory_space=pltpu.MemorySpace.VMEM)
    fn = pl.pallas_call(
        _se_kernel,
        out_shape=jax.ShapeDtypeStruct((Bp, C), jnp.float32),
        in_specs=[vm] * 5,
        out_specs=vm,
        compiler_params=pltpu.CompilerParams(vmem_limit_bytes=_VMEM_LIMIT),
    )
    return jax.jit(fn)


def se_scale(pooled, w1, b1, w2, b2):
    B, C = pooled.shape
    Bp = _round_up(B, 8)
    if Bp != B:
        pooled = jnp.pad(pooled, ((0, Bp - B), (0, 0)))
    return _build_se(Bp, C, w1.shape[1])(pooled, w1, b1, w2, b2)[:B]


# -----------------------------------------------------------------------------
# Fused head: LinearBlock(2048->512, BN, leaky_relu) + LinearBlock(512->10, BN)
# BatchNorm1d uses batch statistics with masked, centered (two-pass) variance.
# -----------------------------------------------------------------------------
def _head_kernel(x_ref, w1_ref, b1_ref, g1_ref, t1_ref,
                 w2_ref, b2_ref, g2_ref, t2_ref, o_ref, *, B):
    valid = jax.lax.broadcasted_iota(jnp.int32, (x_ref.shape[0], 1), 0) < B

    def bn_batch(y):
        ym = jnp.where(valid, y, 0.0)
        mean = jnp.sum(ym, axis=0, keepdims=True) / B
        d = jnp.where(valid, y - mean, 0.0)
        var = jnp.sum(d * d, axis=0, keepdims=True) / B
        return (y - mean) * jax.lax.rsqrt(var + _BN_EPS)

    y1 = jnp.dot(x_ref[...].astype(jnp.bfloat16), w1_ref[...],
                 preferred_element_type=jnp.float32) + b1_ref[...]
    h1 = bn_batch(y1) * g1_ref[...] + t1_ref[...]
    h1 = jnp.where(h1 >= 0.0, h1, 0.01 * h1)          # F.leaky_relu default slope
    y2 = jnp.dot(h1.astype(jnp.bfloat16), w2_ref[...],
                 preferred_element_type=jnp.float32) + b2_ref[...]
    o_ref[...] = bn_batch(y2) * g2_ref[...] + t2_ref[...]


@functools.lru_cache(maxsize=None)
def _build_head(B, Bp, K, H, N2p):
    vm = pl.BlockSpec(memory_space=pltpu.MemorySpace.VMEM)
    fn = pl.pallas_call(
        functools.partial(_head_kernel, B=B),
        out_shape=jax.ShapeDtypeStruct((Bp, N2p), jnp.float32),
        in_specs=[vm] * 9,
        out_specs=vm,
        compiler_params=pltpu.CompilerParams(vmem_limit_bytes=_VMEM_LIMIT),
    )
    return jax.jit(fn)


def head_forward(feat, p):
    B = feat.shape[0]
    Bp = _round_up(B, 8)
    if Bp != B:
        feat = jnp.pad(feat, ((0, Bp - B), (0, 0)))
    out = _build_head(B, Bp, feat.shape[1], p["lin1_w"].shape[1],
                      p["lin2_w"].shape[1])(
        feat, p["lin1_w"], p["lin1_b"], p["lin1_g"], p["lin1_t"],
        p["lin2_w"], p["lin2_b"], p["lin2_g"], p["lin2_t"])
    return out[:B, :p["out_dim"]]


# -----------------------------------------------------------------------------
# Plain-JAX glue: im2col, conv2d wrapper, pooling (layout plumbing / reductions)
# -----------------------------------------------------------------------------
def _im2col(x, kh, kw, stride, padding):
    # (N,H,W,C) -> (N*Ho*Wo, kh*kw*C), K order (ki, kj, c)
    x = x.astype(jnp.bfloat16)
    N, H, W, C = x.shape
    if padding:
        x = jnp.pad(x, ((0, 0), (padding, padding), (padding, padding), (0, 0)))
    Ho = (H + 2 * padding - kh) // stride + 1
    Wo = (W + 2 * padding - kw) // stride + 1
    cols = [x[:, i:i + stride * Ho:stride, j:j + stride * Wo:stride, :]
            for i in range(kh) for j in range(kw)]
    patches = cols[0] if len(cols) == 1 else jnp.concatenate(cols, axis=-1)
    return patches.reshape(N * Ho * Wo, kh * kw * C), (N, Ho, Wo)


def conv2d(x, w_entry, *, bias=None, kh=1, kw=1, stride=1, padding=0,
           prologue=None, want_stats=False):
    # TODO(synk): fold 3x3/7x7 patch extraction into the matmul kernel (manual
    # DMA of overlapping rows) to avoid the KxK im2col materialization in HBM.
    wp, n_out = w_entry
    cols, (N, Ho, Wo) = _im2col(x, kh, kw, stride, padding)
    res = pallas_matmul(cols, wp, n_out, prologue=prologue,
                        want_stats=want_stats)
    if want_stats:
        y, ssum, ssq = res
    else:
        y = res
    if bias is not None:
        y = (y.astype(jnp.float32) + bias[None, :]).astype(jnp.bfloat16)
    y = y.reshape(N, Ho, Wo, n_out)
    if want_stats:
        return y, ssum, ssq, N * Ho * Wo
    return y


def maxpool2d_ceil(x, k=3, s=2):
    N, H, W, C = x.shape
    Ho = -(-(H - k) // s) + 1
    Wo = -(-(W - k) // s) + 1
    ph = max((Ho - 1) * s + k - H, 0)
    pw = max((Wo - 1) * s + k - W, 0)
    xp = jnp.pad(x, ((0, 0), (0, ph), (0, pw), (0, 0)), constant_values=-jnp.inf)
    out = None
    for i in range(k):
        for j in range(k):
            v = xp[:, i:i + s * Ho:s, j:j + s * Wo:s, :]
            out = v if out is None else jnp.maximum(out, v)
    return out


# -----------------------------------------------------------------------------
# se_resnext101_32x4d parameters (deterministic synthetic init, pre-padded /
# pre-cast to bf16 once at build time) and forward
# -----------------------------------------------------------------------------
LAYERS = [(64, 3, 1), (128, 4, 2), (256, 23, 2), (512, 3, 2)]   # (planes, blocks, stride)
GROUPS = 32
REDUCTION = 16
BASE_WIDTH = 4

_rng = np.random.RandomState(0)


def _dense_w(kh, kw, cin, cout):
    """Dense conv weight, pre-padded to (Kp, Np) and pre-cast to bf16."""
    fan_in = kh * kw * cin
    K = kh * kw * cin
    w = _rng.normal(0.0, math.sqrt(2.0 / fan_in), (K, cout)).astype(np.float32)
    Kp, Np = _pad_k(K), _pad_n(cout)
    wp = np.zeros((Kp, Np), np.float32)
    wp[:K, :cout] = w
    return (jnp.asarray(wp, jnp.bfloat16), cout)


def _packed_grouped_w(kh, kw, width, groups, lanes):
    # Grouped conv weights packed into lane-dense (P, kk, L, L) tiles:
    # each pack holds L//cg groups block-diagonally (cross-group entries = 0).
    # TODO(synk): MXU density is cg/L for cg<=8 stages; a denser packing (or a
    # VPU direct conv) would multiply early-stage grouped-conv throughput.
    cg = width // groups
    L = min(lanes, width)
    pack_g = L // cg
    P = width // L
    kkn = kh * kw
    fan_in = kkn * cg
    w = np.zeros((P, kkn, L, L), np.float32)
    for p in range(P):
        for gp in range(pack_g):
            blk = _rng.normal(0.0, math.sqrt(2.0 / fan_in), (kkn, cg, cg))
            w[p, :, gp * cg:(gp + 1) * cg, gp * cg:(gp + 1) * cg] = blk
    return jnp.asarray(w, jnp.bfloat16)


def _se_params(C, red):
    h = C // red
    w1 = _rng.normal(0.0, math.sqrt(2.0 / C), (C, h)).astype(np.float32)
    b1 = _rng.normal(0.0, 0.01, (h,)).astype(np.float32)
    w2 = _rng.normal(0.0, math.sqrt(2.0 / h), (h, C)).astype(np.float32)
    b2 = _rng.normal(0.0, 0.01, (C,)).astype(np.float32)
    Hp = _round_up(h, 128)
    w1p = np.zeros((C, Hp), np.float32); w1p[:, :h] = w1
    b1p = np.zeros((1, Hp), np.float32); b1p[0, :h] = b1
    w2p = np.zeros((Hp, C), np.float32); w2p[:h, :] = w2
    return (jnp.asarray(w1p, jnp.bfloat16), jnp.asarray(b1p),
            jnp.asarray(w2p, jnp.bfloat16), jnp.asarray(b2.reshape(1, C)))


def _bias(c):
    return jnp.asarray(_rng.normal(0.0, 0.01, (c,)), jnp.float32)


def _bn(c):
    return (jnp.ones((c,), jnp.float32), jnp.zeros((c,), jnp.float32))


def build_params(in_channels=1, out_dim=10, hdim=512):
    p = {"conv0_w": _dense_w(3, 3, in_channels, 3), "conv0_b": _bias(3),
         "l0_conv_w": _dense_w(7, 7, 3, 64), "l0_bn": _bn(64)}
    inplanes = 64
    stages = []
    for planes, blocks, stride in LAYERS:
        width = (planes * BASE_WIDTH // 64) * GROUPS
        outc = planes * 4
        blks = []
        for bi in range(blocks):
            blk = {
                "stride": stride if bi == 0 else 1,
                "conv1_w": _dense_w(1, 1, inplanes, width), "bn1": _bn(width),
                "conv2_w": _packed_grouped_w(3, 3, width, GROUPS, _GCONV_LANES),
                "bn2": _bn(width),
                "conv3_w": _dense_w(1, 1, width, outc), "bn3": _bn(outc),
                "se": _se_params(outc, REDUCTION),
            }
            if bi == 0:   # downsample (stride != 1 or channel change)
                blk["down_w"] = _dense_w(1, 1, inplanes, outc)
                blk["down_bn"] = _bn(outc)
            blks.append(blk)
            inplanes = outc
        stages.append(blks)
    p["stages"] = stages

    # Head (pre-padded / pre-cast once).
    w1 = _rng.normal(0.0, math.sqrt(2.0 / inplanes),
                     (inplanes, hdim)).astype(np.float32)
    p["lin1_w"] = jnp.asarray(w1, jnp.bfloat16)
    p["lin1_b"] = jnp.asarray(_rng.normal(0.0, 0.01, (1, hdim)), jnp.float32)
    p["lin1_g"] = jnp.ones((1, hdim), jnp.float32)
    p["lin1_t"] = jnp.zeros((1, hdim), jnp.float32)
    N2p = _round_up(out_dim, 128)
    w2 = np.zeros((hdim, N2p), np.float32)
    w2[:, :out_dim] = _rng.normal(0.0, math.sqrt(2.0 / hdim), (hdim, out_dim))
    p["lin2_w"] = jnp.asarray(w2, jnp.bfloat16)
    b2 = np.zeros((1, N2p), np.float32)
    b2[0, :out_dim] = _rng.normal(0.0, 0.01, (out_dim,))
    p["lin2_b"] = jnp.asarray(b2)
    g2 = np.zeros((1, N2p), np.float32); g2[0, :out_dim] = 1.0
    p["lin2_g"] = jnp.asarray(g2)
    p["lin2_t"] = jnp.zeros((1, N2p), jnp.float32)
    p["out_dim"] = out_dim
    return p


def bottleneck(x, blk):
    # conv1 (1x1): bn1 batch stats emitted by the matmul kernel (no extra read)
    h1, s1sum, s1sq, cnt1 = conv2d(x, blk["conv1_w"], want_stats=True)
    s1, t1 = _scale_shift_from_sums(s1sum, s1sq, cnt1, *blk["bn1"])

    # grouped 3x3: bn1+ReLU applied as a prologue feeding im2col; bn2 batch
    # stats emitted by the grouped-conv kernel
    h2, s2sum, s2sq, cnt2 = grouped_conv3x3(h1, blk["conv2_w"], blk["stride"],
                                            (s1, t1))
    s2, t2 = _scale_shift_from_sums(s2sum, s2sq, cnt2, *blk["bn2"])

    # conv3 (1x1) with bn2+ReLU fused as an in-kernel prologue on the A tile
    out = conv2d(h2, blk["conv3_w"], prologue=(s2, t2))

    # bn3 stats and the SE pooled mean share ONE reduction pass over `out`
    Bn, Ho, Wo, C = out.shape
    outf = out.astype(jnp.float32)
    ps_sum = jnp.sum(outf, axis=(1, 2))          # (B, C)
    ps_sq = jnp.sum(outf * outf, axis=(1, 2))    # (B, C)
    cnt = Bn * Ho * Wo
    s3, t3 = _scale_shift_from_sums(ps_sum.sum(0), ps_sq.sum(0), cnt,
                                    *blk["bn3"])
    pooled = ps_sum / (Ho * Wo) * s3[None, :] + t3[None, :]   # == pool(bn3(out))
    se = se_scale(pooled, *blk["se"])                         # (B, C)

    if "down_w" in blk:
        res, dsum, dsq, dcnt = conv2d(x, blk["down_w"], stride=blk["stride"],
                                      want_stats=True)
        rs, rt = _scale_shift_from_sums(dsum, dsq, dcnt, *blk["down_bn"])
    else:
        res = x
        rs = jnp.ones((C,), jnp.float32)
        rt = jnp.zeros((C,), jnp.float32)

    # relu(bn3(out)*se + bn_down(res)) == relu(out*(s3*se) + (t3*se) + res*rs + rt)
    scale = s3[None, :] * se
    shift = t3[None, :] * se
    return fused_tail(out, scale, shift, res, rs, rt)


def pretrained_cnn_forward(params, x_nchw):
    x = jnp.transpose(x_nchw.astype(jnp.float32), (0, 2, 3, 1))  # NCHW -> NHWC
    # conv0: Conv2d(in_ch, 3, 3, stride=1, padding=1, bias=True)
    h = conv2d(x, params["conv0_w"], bias=params["conv0_b"], kh=3, kw=3,
               stride=1, padding=1)
    # base_model.features (se_resnext101_32x4d): layer0 = 7x7/2 conv + BN +
    # ReLU + ceil maxpool; BN stats come from the matmul kernel, the affine is
    # folded into the maxpool input.
    h, ssum, ssq, cnt = conv2d(h, params["l0_conv_w"], kh=7, kw=7, stride=2,
                               padding=3, want_stats=True)
    s0, t0 = _scale_shift_from_sums(ssum, ssq, cnt, *params["l0_bn"])
    h = jnp.maximum(h.astype(jnp.float32) * s0 + t0, 0.0)
    h = maxpool2d_ceil(h, 3, 2).astype(jnp.bfloat16)
    for blks in params["stages"]:
        for blk in blks:
            h = bottleneck(h, blk)
    # torch.sum(h, dim=(-1, -2))  -> (B, 2048)
    feat = jnp.sum(h.astype(jnp.float32), axis=(1, 2))
    # lin_layers: LinearBlock(2048,512,BN,leaky) + LinearBlock(512,10,BN,None)
    return head_forward(feat, params)


if __name__ == "__main__":
    params = build_params(in_channels=1, out_dim=10)
    x = jax.random.normal(jax.random.PRNGKey(0), (2, 1, 32, 32), jnp.float32)
    out = jax.block_until_ready(pretrained_cnn_forward(params, x))
    assert out.shape == (2, 10), out.shape
    assert bool(jnp.all(jnp.isfinite(out)))
    print("KERNEL_OK")
</pallas_src>

<mosaic_0001>
module attributes {stable_mosaic.version = 11 : i64} {
  func.func @_mm_kernel_impl(%arg0: i32, %arg1: i32, %arg2: i32, %arg3: memref<256x128xbf16, #tpu.memory_space<vmem>>, %arg4: memref<128x128xbf16, #tpu.memory_space<vmem>>, %arg5: memref<256x128xbf16, #tpu.memory_space<vmem>>, %arg6: memref<256x128xf32, #tpu.memory_space<vmem>>) attributes {dimension_semantics = [#tpu.dimension_semantics<parallel>, #tpu.dimension_semantics<parallel>, #tpu.dimension_semantics<arbitrary>], iteration_bounds = array<i64: 8, 1, 1>, scalar_prefetch = 0 : i64, scratch_operands = 1 : i64, tpu.core_type = #tpu.core_type<tc>, window_params = [{transform_indices = @transform_0, window_bounds = array<i64: 256, 128>}, {transform_indices = @transform_1, window_bounds = array<i64: 128, 128>}, {transform_indices = @transform_2, window_bounds = array<i64: 256, 128>}]} {
    %c0_i32 = arith.constant 0 : i32
    %0 = arith.cmpi eq, %arg2, %c0_i32 : i32
    %1 = arith.extui %0 : i1 to i32
    %c0_i32_0 = arith.constant 0 : i32
    %2 = arith.cmpi ne, %1, %c0_i32_0 : i32
    scf.if %2 {
      %cst_10 = arith.constant 0.000000e+00 : f32
      %12 = vector.broadcast %cst_10 : f32 to vector<256x128xf32>
      %c0_11 = arith.constant 0 : index
      %c0_12 = arith.constant 0 : index
      %13 = vector.load %arg6[%c0_11, %c0_12] : memref<256x128xf32, #tpu.memory_space<vmem>>, vector<256x128xf32>
      tpu.vector_store %arg6[%c0_11, %c0_12], %12 {strides = array<i32>} : memref<256x128xf32, #tpu.memory_space<vmem>>, vector<256x128xf32>,
    } else {
    }
    %c0 = arith.constant 0 : index
    %c0_1 = arith.constant 0 : index
    %3 = vector.load %arg3[%c0, %c0_1] : memref<256x128xbf16, #tpu.memory_space<vmem>>, vector<256x128xbf16>
    %c0_2 = arith.constant 0 : index
    %c0_3 = arith.constant 0 : index
    %4 = vector.load %arg6[%c0_2, %c0_3] : memref<256x128xf32, #tpu.memory_space<vmem>>, vector<256x128xf32>
    %c0_4 = arith.constant 0 : index
    %c0_5 = arith.constant 0 : index
    %5 = vector.load %arg4[%c0_4, %c0_5] : memref<128x128xbf16, #tpu.memory_space<vmem>>, vector<128x128xbf16>
    %cst = arith.constant dense<0.000000e+00> : vector<256x128xf32>
    %6 = tpu.matmul %3, %5, %cst {dimension_numbers = #tpu.dot_dimension_numbers<[1], [0], [0], [1], [0, 0, 1, 1], [], []>} : vector<256x128xbf16>, vector<128x128xbf16>, vector<256x128xf32> -> vector<256x128xf32>
    %7 = arith.addf %4, %6 : vector<256x128xf32>
    %c0_6 = arith.constant 0 : index
    %c0_7 = arith.constant 0 : index
    %8 = vector.load %arg6[%c0_6, %c0_7] : memref<256x128xf32, #tpu.memory_space<vmem>>, vector<256x128xf32>
    tpu.vector_store %arg6[%c0_6, %c0_7], %7 {strides = array<i32>} : memref<256x128xf32, #tpu.memory_space<vmem>>, vector<256x128xf32>,
    %c0_i32_8 = arith.constant 0 : i32
    %9 = arith.cmpi eq, %arg2, %c0_i32_8 : i32
    %10 = arith.extui %9 : i1 to i32
    %c0_i32_9 = arith.constant 0 : i32
    %11 = arith.cmpi ne, %10, %c0_i32_9 : i32
    scf.if %11 {
      %c0_10 = arith.constant 0 : index
      %c0_11 = arith.constant 0 : index
      %12 = vector.load %arg6[%c0_10, %c0_11] : memref<256x128xf32, #tpu.memory_space<vmem>>, vector<256x128xf32>
      %13 = arith.truncf %12 : vector<256x128xf32> to vector<256x128xbf16>
      %c0_12 = arith.constant 0 : index
      %c0_13 = arith.constant 0 : index
      %14 = vector.load %arg5[%c0_12, %c0_13] : memref<256x128xbf16, #tpu.memory_space<vmem>>, vector<256x128xbf16>
      tpu.vector_store %arg5[%c0_12, %c0_13], %13 {strides = array<i32>} : memref<256x128xbf16, #tpu.memory_space<vmem>>, vector<256x128xbf16>,
    } else {
    }
    return
  }
  func.func @transform_0(%arg0: i32, %arg1: i32, %arg2: i32) -> (i32, i32) {
    %c0_i32 = arith.constant 0 : i32
    return %arg0, %arg2 : i32, i32
  }
  func.func @transform_1(%arg0: i32, %arg1: i32, %arg2: i32) -> (i32, i32) {
    %c0_i32 = arith.constant 0 : i32
    return %arg2, %arg1 : i32, i32
  }
  func.func @transform_2(%arg0: i32, %arg1: i32, %arg2: i32) -> (i32, i32) {
    %c0_i32 = arith.constant 0 : i32
    return %arg0, %arg1 : i32, i32
  }
}

</mosaic_0001>

<llo_original>
// kernel: tpu_custom_call.1
$region0: #{tpu_custom_call.1}
  #allocation0 [shape = 'u32[]', space=smem, size = 0x4, offset = 0x4, fixed_abs, tag = 'smem constant byte address 0x4 - core index']
  #allocation1 [shape = 'u32[144,128]{1,0:T(1,128)}', space=vmem, size = 0x12000, scoped, tag = 'internal scratch']
  #allocation2 [shape = 'f32[256,128]{1,0:T(8,128)}', space=vmem, size = 0x20000, scoped, tag = 'scratch operand']
  %s0 = inlined_call_operand.hbm [shape: bf16[2048,128], index: 0, kind: input, shape index: {}]
  %s1 = inlined_call_operand.hbm [shape: bf16[128,128], index: 1, kind: input, shape index: {}]
  %s2 = inlined_call_operand.hbm [shape: bf16[2048,128], index: 2, kind: output, shape index: {}]
  %s3 = sld [smem:[#allocation0]]
  $region57: #{tpu_custom_call.1} parent=0
    _
  %s5 = ssub.s32 1, %s3
  %s6 = scalar_select 0, %s5, %s3
  $region1: #{tpu_custom_call.1} parent=0
    #allocation3 [shape = 'u8[131072]{0}', space=vmem, size = 0x20000, scoped, tag = 'input window, operand 0']
    #allocation4 [shape = 's32[2]{0}', space=sflag, size = 0x8, scoped, tag = 'scoped memory for tpu_custom_call.1']
    #allocation5 [shape = 's32[2]{0}', space=sflag, size = 0x8, scoped, tag = 'scoped memory for tpu_custom_call.1']
    #allocation6 [shape = 'u8[32768]{0}', space=vmem, size = 0x8000, scoped, tag = 'input window, operand 1, single buffered']
    #allocation7 [shape = 's32[1]{0}', space=sflag, size = 0x4, scoped, tag = 'scoped memory for tpu_custom_call.1']
    #allocation8 [shape = 'u8[131072]{0}', space=vmem, size = 0x20000, scoped, tag = 'output window, operand 0']
    %7 = vsyncpa [#allocation4], 0
    %s8 = scalar_lea.sflag [#allocation4], 1
    %9 = vsyncpa %s8, 0
    %10 = vsyncpa [#allocation7], 0
    %11 = vsyncpa [#allocation5], 0
    %s12 = scalar_lea.sflag [#allocation5], 1
    %13 = vsyncpa %s12, 0
    loop: start=0, step=1, limit=10
    $region2: #{tpu_custom_call.1} parent=1 // loop_pre_header
      _
    $region3: #{tpu_custom_call.1} parent=1 // loop_header
      %s15 = sphi 0, %s19
      %p16 = scmp.ge.s32.totalorder %s15, 10
      %s22 = sphi 0, %s41
      %s23 = sphi 0, %s37
      %s24 = sphi 0, %s33
      %s25 = sphi 0, %s22
      %s26 = sphi 0, %s23
      %s27 = sphi 0, %s24
      %s28 = sphi 0, %s25
      %s29 = sphi 0, %s26
      %s30 = sphi 0, %s27
      %s46 = sphi 0, %s48
      %s49 = sphi 0, %s46
      %s50 = sphi 0, %s49
      %s66 = sphi 0, %s50
      %s74 = sphi 0, %s76
      %s77 = sphi 0, %s74
      %s78 = sphi 0, %s77
      %s94 = sphi 0, %s78
      %s102 = sphi 0, %s104
      %s105 = sphi 0, %s102
      %s106 = sphi 0, %s105
      %s122 = sphi 0, %s106
    $region4: #{tpu_custom_call.1} parent=1 // loop_header_branch
      %18 = sbr.rel (%p16) target = $region8
    $region5: #{tpu_custom_call.1} parent=1 // loop_body
      %s20 = ssub.s32 %s15, 1
      %s21 = ssub.s32 %s15, 2
      %s31 = sadd.s32 1, %s24
      %p32 = scmp.ge.s32.totalorder %s31, 1
      %s33 = scalar_select %p32, 0, %s31
      %s34 = sadd.s32 1, %s23
      %s35 = scalar_select %p32, %s34, %s23
      %p36 = scmp.ge.s32.totalorder %s35, 1
      %s37 = scalar_select %p36, 0, %s35
      %s38 = sadd.s32 1, %s22
      %s39 = scalar_select %p36, %s38, %s22
      %p40 = scmp.ge.s32.totalorder %s39, 8
      %s41 = scalar_select %p40, 0, %s39
      %s42 = ssub.s32 %s22, %s41
      %s43 = ssub.s32 %s24, %s33
      %s44 = sor.u32 %s42, %s43
      %p45 = scmp.eq.s32.totalorder %s44, 0
      %s47 = sadd.s32 %s46, 1
      %s48 = scalar_select %p45, %s46, %s47
      %p51 = pneg %p45
      %p52 = scmp.eq.s32.totalorder %s15, 7
      %p53 = por %p51, %p52
      %p54 = scmp.ne.s32.totalorder %s46, %s49
      %p55 = scmp.eq.s32.totalorder %s15, 0
      %p56 = por %p54, %p55
      %p57 = scmp.ne.s32.totalorder %s46, %s49
      %p58 = scmp.eq.s32.totalorder %s20, 7
      %p59 = por %p57, %p58
      %p60 = scmp.ne.s32.totalorder %s49, %s50
      %p61 = scmp.eq.s32.totalorder %s20, 0
      %p62 = por %p60, %p61
      %p63 = scmp.ne.s32.totalorder %s49, %s50
      %p64 = scmp.eq.s32.totalorder %s21, 7
      %p65 = por %p63, %p64
      %p67 = scmp.ne.s32.totalorder %s50, %s66
      %p68 = scmp.eq.s32.totalorder %s21, 0
      %p69 = por %p67, %p68
      %s70 = ssub.s32 %s24, %s33
      %s71 = ssub.s32 %s23, %s37
      %s72 = sor.u32 %s70, %s71
      %p73 = scmp.eq.s32.totalorder %s72, 0
      %s75 = sadd.s32 %s74, 1
      %s76 = scalar_select %p73, %s74, %s75
      %p79 = pneg %p73
      %p80 = scmp.eq.s32.totalorder %s15, 7
      %p81 = por %p79, %p80
      %p82 = scmp.ne.s32.totalorder %s74, %s77
      %p83 = scmp.eq.s32.totalorder %s15, 0
      %p84 = por %p82, %p83
      %p85 = scmp.ne.s32.totalorder %s74, %s77
      %p86 = scmp.eq.s32.totalorder %s20, 7
      %p87 = por %p85, %p86
      %p88 = scmp.ne.s32.totalorder %s77, %s78
      %p89 = scmp.eq.s32.totalorder %s20, 0
      %p90 = por %p88, %p89
      %p91 = scmp.ne.s32.totalorder %s77, %s78
      %p92 = scmp.eq.s32.totalorder %s21, 7
      %p93 = por %p91, %p92
      %p95 = scmp.ne.s32.totalorder %s78, %s94
      %p96 = scmp.eq.s32.totalorder %s21, 0
      %p97 = por %p95, %p96
      %s98 = ssub.s32 %s22, %s41
      %s99 = ssub.s32 %s23, %s37
      %s100 = sor.u32 %s98, %s99
      %p101 = scmp.eq.s32.totalorder %s100, 0
      %s103 = sadd.s32 %s102, 1
      %s104 = scalar_select %p101, %s102, %s103
      %p107 = pneg %p101
      %p108 = scmp.eq.s32.totalorder %s15, 7
      %p109 = por %p107, %p108
      %p110 = scmp.ne.s32.totalorder %s102, %s105
      %p111 = scmp.eq.s32.totalorder %s15, 0
      %p112 = por %p110, %p111
      %p113 = scmp.ne.s32.totalorder %s102, %s105
      %p114 = scmp.eq.s32.totalorder %s20, 7
      %p115 = por %p113, %p114
      %p116 = scmp.ne.s32.totalorder %s105, %s106
      %p117 = scmp.eq.s32.totalorder %s20, 0
      %p118 = por %p116, %p117
      %p119 = scmp.ne.s32.totalorder %s105, %s106
      %p120 = scmp.eq.s32.totalorder %s21, 7
      %p121 = por %p119, %p120
      %p123 = scmp.ne.s32.totalorder %s106, %s122
      %p124 = scmp.eq.s32.totalorder %s21, 0
      %p125 = por %p123, %p124
      %p126 = scmp.le.s32.totalorder 1, %s15
      %p127 = scmp.lt.s32.totalorder %s15, 9
      %p128 = pnand %p126, %p127
      %p129 = pneg %p128
      // Predicated region
      $region9: #{tpu_custom_call.1} parent=5 // pred_check
        _
      $region10: #{tpu_custom_call.1} parent=5 // pred_check_branch
        %131 = sbr.rel (%p128) target = $region12
      $region11: #{tpu_custom_call.1} parent=5 // pred_region
        %s132 = ssub.s32 %s15, 1
        // Predicated region
        $region13: #{tpu_custom_call.1} parent=11 // pred_check
          %p133 = pneg %p90
        $region14: #{tpu_custom_call.1} parent=11 // pred_check_branch
          %135 = sbr.rel (%p133) target = $region16
        $region15: #{tpu_custom_call.1} parent=11 // pred_region
          %s136 = smul.u32 16, %s27
          %s138 = ssub.s32 1024, 1024
          %139 = vsyncadd [#allocation7], %s138
          %s140 = sadd.s32 %s26, %s136
          %s141 = smul.addr %s140, 64
          %s142 = scalar_lea.hbm %s1, %s141
          %s143 = sshll.u32 [#allocation6], 4
          %s144 = int_to_ptr.vmem [resolvable:$true] %s143
          %149 = dma.hbm_to_vmem [thread:$0]  %s142, 1024, %s144, [#allocation7], 64, 64, 4
        $region16: #{tpu_custom_call.1} parent=11 // pred_fallthru
          _
      $region12: #{tpu_custom_call.1} parent=5 // pred_fallthru
        _
      %p150 = scmp.lt.s32.totalorder %s15, 8
      // Predicated region
      $region17: #{tpu_custom_call.1} parent=5 // pred_check
        %p151 = pneg %p150
      $region18: #{tpu_custom_call.1} parent=5 // pred_check_branch
        %153 = sbr.rel (%p151) target = $region20
      $region19: #{tpu_custom_call.1} parent=5 // pred_region
        // Predicated region
        $region21: #{tpu_custom_call.1} parent=19 // pred_check
          %p154 = pneg %p56
        $region22: #{tpu_custom_call.1} parent=19 // pred_check_branch
          %156 = sbr.rel (%p154) target = $region24
        $region23: #{tpu_custom_call.1} parent=19 // pred_region
          %s157 = sand.u32 %s46, 1
          %s158 = scalar_lea.sflag [#allocation4], %s157
          %s159 = sand.u32 %s46, 1
          %s160 = smul.addr %s159, 128
          %s161 = scalar_lea.vmem [#allocation3], %s160
          %s162 = smul.u32 32, %s22
          %s164 = ssub.s32 2048, 2048
          %165 = vsyncadd %s158, %s164
          %s166 = sadd.s32 %s24, %s162
          %s167 = smul.addr %s166, 64
          %s168 = scalar_lea.hbm %s0, %s167
          %s169 = sshll.u32 %s161, 4
          %s170 = int_to_ptr.vmem [resolvable:$true] %s169
          %175 = dma.hbm_to_vmem [thread:$0]  %s168, 2048, %s170, %s158, 64, 64, 4
        $region24: #{tpu_custom_call.1} parent=19 // pred_fallthru
          _
      $region20: #{tpu_custom_call.1} parent=5 // pred_fallthru
        _
      %p176 = scmp.le.s32.totalorder 1, %s15
      %p177 = scmp.lt.s32.totalorder %s15, 9
      %p178 = pnand %p176, %p177
      %p179 = pneg %p178
      // Predicated region
      $region25: #{tpu_custom_call.1} parent=5 // pred_check
        _
      $region26: #{tpu_custom_call.1} parent=5 // pred_check_branch
        %181 = sbr.rel (%p178) target = $region28
      $region27: #{tpu_custom_call.1} parent=5 // pred_region
        %s182 = ssub.s32 %s15, 1
        %s183 = sand.u32 %s49, 1
        %s184 = scalar_lea.sflag [#allocation4], %s183
        %s185 = sand.u32 %s49, 1
        %s186 = smul.addr %s185, 128
        %s187 = scalar_lea.vmem [#allocation3], %s186
        // Predicated region
        $region29: #{tpu_custom_call.1} parent=27 // pred_check
          %p188 = pneg %p62
        $region30: #{tpu_custom_call.1} parent=27 // pred_check_branch
          %190 = sbr.rel (%p188) target = $region32
        $region31: #{tpu_custom_call.1} parent=27 // pred_region
          %191 = dma.done %s184, 2048
        $region32: #{tpu_custom_call.1} parent=27 // pred_fallthru
          _
        // Predicated region
        $region33: #{tpu_custom_call.1} parent=27 // pred_check
          %p192 = pneg %p90
        $region34: #{tpu_custom_call.1} parent=27 // pred_check_branch
          %194 = sbr.rel (%p192) target = $region36
        $region35: #{tpu_custom_call.1} parent=27 // pred_region
          %195 = dma.done [#allocation7], 1024
        $region36: #{tpu_custom_call.1} parent=27 // pred_fallthru
          _
        %s196 = sand.u32 %s49, 1
        %s197 = scalar_lea.sflag [#allocation4], %s196
        %s198 = sand.u32 %s49, 1
        %s199 = smul.addr %s198, 128
        %s200 = scalar_lea.vmem [#allocation3], %s199
        %p201 = pneg %p62
        %p202 = pneg %p59
        %p203 = pneg %p90
        %p204 = pneg %p87
        %p205 = pneg %p118
        %p206 = pneg %p115
        %s207 = sand.u32 %s105, 1
        %s208 = scalar_lea.sflag [#allocation5], %s207
        %s209 = sand.u32 %s105, 1
        %s210 = smul.addr %s209, 128
        %s211 = scalar_lea.vmem [#allocation8], %s210
        %s212 = smul.u32 32, %s25
        %s213 = smul.u32 16, %s27
        %s214 = smul.u32 32, %s25
        %p216 = scmp.eq.s32.totalorder %s27, 0
        // Predicated region
        $region37: #{tpu_custom_call.1} parent=27 // pred_check
          %p217 = pneg %p216
        $region38: #{tpu_custom_call.1} parent=27 // pred_check_branch
          %219 = sbr.rel (%p217) target = $region40
        $region39: #{tpu_custom_call.1} parent=27 // pred_region
          %220 = vst [vmem:[#allocation2] sm:$0xff] 0.0
          %221 = vst [vmem:[#allocation2 + $0x8] sm:$0xff] 0.0
          %222 = vst [vmem:[#allocation2 + $0x10] sm:$0xff] 0.0
          %223 = vst [vmem:[#allocation2 + $0x18] sm:$0xff] 0.0
          %224 = vst [vmem:[#allocation2 + $0x20] sm:$0xff] 0.0
          %225 = vst [vmem:[#allocation2 + $0x28] sm:$0xff] 0.0
          %226 = vst [vmem:[#allocation2 + $0x30] sm:$0xff] 0.0
          %227 = vst [vmem:[#allocation2 + $0x38] sm:$0xff] 0.0
          %228 = vst [vmem:[#allocation2 + $0x40] sm:$0xff] 0.0
          %229 = vst [vmem:[#allocation2 + $0x48] sm:$0xff] 0.0
          %230 = vst [vmem:[#allocation2 + $0x50] sm:$0xff] 0.0
          %231 = vst [vmem:[#allocation2 + $0x58] sm:$0xff] 0.0
          %232 = vst [vmem:[#allocation2 + $0x60] sm:$0xff] 0.0
          %233 = vst [vmem:[#allocation2 + $0x68] sm:$0xff] 0.0
          %234 = vst [vmem:[#allocation2 + $0x70] sm:$0xff] 0.0
          %235 = vst [vmem:[#allocation2 + $0x78] sm:$0xff] 0.0
          %236 = vst [vmem:[#allocation2 + $0x80] sm:$0xff] 0.0
          %237 = vst [vmem:[#allocation2 + $0x88] sm:$0xff] 0.0
          %238 = vst [vmem:[#allocation2 + $0x90] sm:$0xff] 0.0
          %239 = vst [vmem:[#allocation2 + $0x98] sm:$0xff] 0.0
          %240 = vst [vmem:[#allocation2 + $0xa0] sm:$0xff] 0.0
          %241 = vst [vmem:[#allocation2 + $0xa8] sm:$0xff] 0.0
          %242 = vst [vmem:[#allocation2 + $0xb0] sm:$0xff] 0.0
          %243 = vst [vmem:[#allocation2 + $0xb8] sm:$0xff] 0.0
          %244 = vst [vmem:[#allocation2 + $0xc0] sm:$0xff] 0.0
          %245 = vst [vmem:[#allocation2 + $0xc8] sm:$0xff] 0.0
          %246 = vst [vmem:[#allocation2 + $0xd0] sm:$0xff] 0.0
          %247 = vst [vmem:[#allocation2 + $0xd8] sm:$0xff] 0.0
          %248 = vst [vmem:[#allocation2 + $0xe0] sm:$0xff] 0.0
          %249 = vst [vmem:[#allocation2 + $0xe8] sm:$0xff] 0.0
          %250 = vst [vmem:[#allocation2 + $0xf0] sm:$0xff] 0.0
          %251 = vst [vmem:[#allocation2 + $0xf8] sm:$0xff] 0.0
        $region40: #{tpu_custom_call.1} parent=27 // pred_fallthru
          _
        %v252 = vld [vmem:[%s187] sm:$0xf]
        %v253 = vld [vmem:[%s187 + $0x4] sm:$0xf]
        %v254 = vld [vmem:[%s187 + $0x8] sm:$0xf]
        %v255 = vld [vmem:[%s187 + $0xc] sm:$0xf]
        %v256 = vld [vmem:[%s187 + $0x10] sm:$0xf]
        %v257 = vld [vmem:[%s187 + $0x14] sm:$0xf]
        %v258 = vld [vmem:[%s187 + $0x18] sm:$0xf]
        %v259 = vld [vmem:[%s187 + $0x1c] sm:$0xf]
        %v260 = vld [vmem:[%s187 + $0x20] sm:$0xf]
        %v261 = vld [vmem:[%s187 + $0x24] sm:$0xf]
        %v262 = vld [vmem:[%s187 + $0x28] sm:$0xf]
        %v263 = vld [vmem:[%s187 + $0x2c] sm:$0xf]
        %v264 = vld [vmem:[%s187 + $0x30] sm:$0xf]
        %v265 = vld [vmem:[%s187 + $0x34] sm:$0xf]
        %v266 = vld [vmem:[%s187 + $0x38] sm:$0xf]
        %v267 = vld [vmem:[%s187 + $0x3c] sm:$0xf]
        %v268 = vld [vmem:[%s187 + $0x40] sm:$0xf]
        %v269 = vld [vmem:[%s187 + $0x44] sm:$0xf]
        %v270 = vld [vmem:[%s187 + $0x48] sm:$0xf]
        %v271 = vld [vmem:[%s187 + $0x4c] sm:$0xf]
        %v272 = vld [vmem:[%s187 + $0x50] sm:$0xf]
        %v273 = vld [vmem:[%s187 + $0x54] sm:$0xf]
        %v274 = vld [vmem:[%s187 + $0x58] sm:$0xf]
        %v275 = vld [vmem:[%s187 + $0x5c] sm:$0xf]
        %v276 = vld [vmem:[%s187 + $0x60] sm:$0xf]
        %v277 = vld [vmem:[%s187 + $0x64] sm:$0xf]
        %v278 = vld [vmem:[%s187 + $0x68] sm:$0xf]
        %v279 = vld [vmem:[%s187 + $0x6c] sm:$0xf]
        %v280 = vld [vmem:[%s187 + $0x70] sm:$0xf]
        %v281 = vld [vmem:[%s187 + $0x74] sm:$0xf]
        %v282 = vld [vmem:[%s187 + $0x78] sm:$0xf]
        %v283 = vld [vmem:[%s187 + $0x7c] sm:$0xf]
        %v284 = vld [vmem:[#allocation2] sm:$0xff]
        %v285 = vld [vmem:[#allocation2 + $0x8] sm:$0xff]
        %v286 = vld [vmem:[#allocation2 + $0x10] sm:$0xff]
        %v287 = vld [vmem:[#allocation2 + $0x18] sm:$0xff]
        %v288 = vld [vmem:[#allocation2 + $0x20] sm:$0xff]
        %v289 = vld [vmem:[#allocation2 + $0x28] sm:$0xff]
        %v290 = vld [vmem:[#allocation2 + $0x30] sm:$0xff]
        %v291 = vld [vmem:[#allocation2 + $0x38] sm:$0xff]
        %v292 = vld [vmem:[#allocation2 + $0x40] sm:$0xff]
        %v293 = vld [vmem:[#allocation2 + $0x48] sm:$0xff]
        %v294 = vld [vmem:[#allocation2 + $0x50] sm:$0xff]
        %v295 = vld [vmem:[#allocation2 + $0x58] sm:$0xff]
        %v296 = vld [vmem:[#allocation2 + $0x60] sm:$0xff]
        %v297 = vld [vmem:[#allocation2 + $0x68] sm:$0xff]
        %v298 = vld [vmem:[#allocation2 + $0x70] sm:$0xff]
        %v299 = vld [vmem:[#allocation2 + $0x78] sm:$0xff]
        %v300 = vld [vmem:[#allocation2 + $0x80] sm:$0xff]
        %v301 = vld [vmem:[#allocation2 + $0x88] sm:$0xff]
        %v302 = vld [vmem:[#allocation2 + $0x90] sm:$0xff]
        %v303 = vld [vmem:[#allocation2 + $0x98] sm:$0xff]
        %v304 = vld [vmem:[#allocation2 + $0xa0] sm:$0xff]
        %v305 = vld [vmem:[#allocation2 + $0xa8] sm:$0xff]
        %v306 = vld [vmem:[#allocation2 + $0xb0] sm:$0xff]
        %v307 = vld [vmem:[#allocation2 + $0xb8] sm:$0xff]
        %v308 = vld [vmem:[#allocation2 + $0xc0] sm:$0xff]
        %v309 = vld [vmem:[#allocation2 + $0xc8] sm:$0xff]
        %v310 = vld [vmem:[#allocation2 + $0xd0] sm:$0xff]
        %v311 = vld [vmem:[#allocation2 + $0xd8] sm:$0xff]
        %v312 = vld [vmem:[#allocation2 + $0xe0] sm:$0xff]
        %v313 = vld [vmem:[#allocation2 + $0xe8] sm:$0xff]
        %v314 = vld [vmem:[#allocation2 + $0xf0] sm:$0xff]
        %v315 = vld [vmem:[#allocation2 + $0xf8] sm:$0xff]
        %v316 = vld [vmem:[#allocation6] sm:$0xf]
        %v317 = vld [vmem:[#allocation6 + $0x4] sm:$0xf]
        %v318 = vld [vmem:[#allocation6 + $0x8] sm:$0xf]
        %v319 = vld [vmem:[#allocation6 + $0xc] sm:$0xf]
        %v320 = vld [vmem:[#allocation6 + $0x10] sm:$0xf]
        %v321 = vld [vmem:[#allocation6 + $0x14] sm:$0xf]
        %v322 = vld [vmem:[#allocation6 + $0x18] sm:$0xf]
        %v323 = vld [vmem:[#allocation6 + $0x1c] sm:$0xf]
        %v324 = vld [vmem:[#allocation6 + $0x20] sm:$0xf]
        %v325 = vld [vmem:[#allocation6 + $0x24] sm:$0xf]
        %v326 = vld [vmem:[#allocation6 + $0x28] sm:$0xf]
        %v327 = vld [vmem:[#allocation6 + $0x2c] sm:$0xf]
        %v328 = vld [vmem:[#allocation6 + $0x30] sm:$0xf]
        %v329 = vld [vmem:[#allocation6 + $0x34] sm:$0xf]
        %v330 = vld [vmem:[#allocation6 + $0x38] sm:$0xf]
        %v331 = vld [vmem:[#allocation6 + $0x3c] sm:$0xf]
        %v364 = vunpack.c.l.b16 %v252
        %v365 = vunpack.c.l.b16 %v253
        %v366 = vunpack.c.l.b16 %v254
        %v367 = vunpack.c.l.b16 %v255
        %v368 = vunpack.c.l.b16 %v256
        %v369 = vunpack.c.l.b16 %v257
        %v370 = vunpack.c.l.b16 %v258
        %v371 = vunpack.c.l.b16 %v259
        %v372 = vunpack.c.l.b16 %v260
        %v373 = vunpack.c.l.b16 %v261
        %v374 = vunpack.c.l.b16 %v262
        %v375 = vunpack.c.l.b16 %v263
        %v376 = vunpack.c.l.b16 %v264
        %v377 = vunpack.c.l.b16 %v265
        %v378 = vunpack.c.l.b16 %v266
        %v379 = vunpack.c.l.b16 %v267
        %v380 = vunpack.c.l.b16 %v268
        %v381 = vunpack.c.l.b16 %v269
        %v382 = vunpack.c.l.b16 %v270
        %v383 = vunpack.c.l.b16 %v271
        %v384 = vunpack.c.l.b16 %v272
        %v385 = vunpack.c.l.b16 %v273
        %v386 = vunpack.c.l.b16 %v274
        %v387 = vunpack.c.l.b16 %v275
        %v388 = vunpack.c.l.b16 %v276
        %v389 = vunpack.c.l.b16 %v277
        %v390 = vunpack.c.l.b16 %v278
        %v391 = vunpack.c.l.b16 %v279
        %v392 = vunpack.c.l.b16 %v280
        %v393 = vunpack.c.l.b16 %v281
        %v394 = vunpack.c.l.b16 %v282
        %v395 = vunpack.c.l.b16 %v283
        %v396 = vpack.c.b16 %v365, %v364
        %v397 = vpack.c.b16 %v367, %v366
        %v398 = vpack.c.b16 %v369, %v368
        %v399 = vpack.c.b16 %v371, %v370
        %v400 = vpack.c.b16 %v373, %v372
        %v401 = vpack.c.b16 %v375, %v374
        %v402 = vpack.c.b16 %v377, %v376
        %v403 = vpack.c.b16 %v379, %v378
        %v404 = vpack.c.b16 %v381, %v380
        %v405 = vpack.c.b16 %v383, %v382
        %v406 = vpack.c.b16 %v385, %v384
        %v407 = vpack.c.b16 %v387, %v386
        %v408 = vpack.c.b16 %v389, %v388
        %v409 = vpack.c.b16 %v391, %v390
        %v410 = vpack.c.b16 %v393, %v392
        %v411 = vpack.c.b16 %v395, %v394
        %v444 = vunpack.c.l.b16 %v316
        %v445 = vunpack.c.l.b16 %v317
        %v446 = vunpack.c.l.b16 %v318
        %v447 = vunpack.c.l.b16 %v319
        %v448 = vunpack.c.l.b16 %v320
        %v449 = vunpack.c.l.b16 %v321
        %v450 = vunpack.c.l.b16 %v322
        %v451 = vunpack.c.l.b16 %v323
        %v452 = vunpack.c.l.b16 %v324
        %v453 = vunpack.c.l.b16 %v325
        %v454 = vunpack.c.l.b16 %v326
        %v455 = vunpack.c.l.b16 %v327
        %v456 = vunpack.c.l.b16 %v328
        %v457 = vunpack.c.l.b16 %v329
        %v458 = vunpack.c.l.b16 %v330
        %v459 = vunpack.c.l.b16 %v331
        %v460 = vpack.c.b16 %v445, %v444
        %v461 = vpack.c.b16 %v447, %v446
        %v462 = vpack.c.b16 %v449, %v448
        %v463 = vpack.c.b16 %v451, %v450
        %v464 = vpack.c.b16 %v453, %v452
        %v465 = vpack.c.b16 %v455, %v454
        %v466 = vpack.c.b16 %v457, %v456
        %v467 = vpack.c.b16 %v459, %v458
        %476 = vmatprep.subr.bf16.mxu0 0
        %477 = vmatpush1.bf16.msra.mxu0 %v460
        %478 = vmatprep.subr.bf16.mxu0 0
        %479 = vmatpush1.bf16.msra.mxu0 %v461
        %480 = vmatprep.subr.bf16.mxu0 0
        %481 = vmatpush1.bf16.msra.mxu0 %v462
        %482 = vmatprep.subr.bf16.mxu0 0
        %483 = vmatpush1.bf16.msra.mxu0 %v463
        %484 = vmatprep.subr.bf16.mxu0 0
        %485 = vmatpush1.bf16.msra.mxu0 %v464
        %486 = vmatprep.subr.bf16.mxu0 0
        %487 = vmatpush1.bf16.msra.mxu0 %v465
        %488 = vmatprep.subr.bf16.mxu0 0
        %489 = vmatpush1.bf16.msra.mxu0 %v466
        %490 = vmatprep.subr.bf16.mxu0 0
        %491 = vmatpush1.bf16.msra.mxu0 %v467
        %492 = vmatprep.subr.bf16.mxu0 0
        %493 = vmatpush1.bf16.msra.mxu0 0
        %494 = vmatprep.subr.bf16.mxu0 0
        %495 = vmatpush1.bf16.msra.mxu0 0
        %496 = vmatprep.subr.bf16.mxu0 0
        %497 = vmatpush1.bf16.msra.mxu0 0
        %498 = vmatprep.subr.bf16.mxu0 0
        %499 = vmatpush1.bf16.msra.mxu0 0
        %500 = vmatprep.subr.bf16.mxu0 0
        %501 = vmatpush1.bf16.msra.mxu0 0
        %502 = vmatprep.subr.bf16.mxu0 0
        %503 = vmatpush1.bf16.msra.mxu0 0
        %504 = vmatprep.subr.bf16.mxu0 0
        %505 = vmatpush1.bf16.msra.mxu0 0
        %506 = vmatprep.subr.bf16.mxu0 0
        %507 = vmatpush1.bf16.msra.mxu0 0
        %508 = vmatprep.mubr.bf16.mxu0 0
        %509 = vmatmul.mubr.bf16.gmra.mrb[0].mxu0 %v396
        %v510 = vpop.f32.mrb[0].mxu0
        %v511 = vadd.f32 0.0, %v510
        %v512 = vpop.f32.mrb[0].mxu0
        %v513 = vpop.f32.mrb[0].mxu0
        %v514 = vadd.f32 0.0, %v513
        %v515 = vpop.f32.mrb[0].mxu0
        %516 = vmatprep.mubr.bf16.mxu0 0
        %517 = vmatmul.mubr.bf16.gmra.mrb[0].mxu0 %v397
        %v518 = vpop.f32.mrb[0].mxu0
        %v519 = vadd.f32 0.0, %v518
        %v520 = vpop.f32.mrb[0].mxu0
        %v521 = vpop.f32.mrb[0].mxu0
        %v522 = vadd.f32 0.0, %v521
        %v523 = vpop.f32.mrb[0].mxu0
        %524 = vmatprep.mubr.bf16.mxu0 0
        %525 = vmatmul.mubr.bf16.gmra.mrb[0].mxu0 %v398
        %v526 = vpop.f32.mrb[0].mxu0
        %v527 = vadd.f32 0.0, %v526
        %v528 = vpop.f32.mrb[0].mxu0
        %v529 = vpop.f32.mrb[0].mxu0
        %v530 = vadd.f32 0.0, %v529
        %v531 = vpop.f32.mrb[0].mxu0
        %532 = vmatprep.mubr.bf16.mxu0 0
        %533 = vmatmul.mubr.bf16.gmra.mrb[0].mxu0 %v399
        %v534 = vpop.f32.mrb[0].mxu0
        %v535 = vadd.f32 0.0, %v534
        %v536 = vpop.f32.mrb[0].mxu0
        %v537 = vpop.f32.mrb[0].mxu0
        %v538 = vadd.f32 0.0, %v537
        %v539 = vpop.f32.mrb[0].mxu0
        %540 = vmatprep.mubr.bf16.mxu0 0
        %541 = vmatmul.mubr.bf16.gmra.mrb[0].mxu0 %v400
        %v542 = vpop.f32.mrb[0].mxu0
        %v543 = vadd.f32 0.0, %v542
        %v544 = vpop.f32.mrb[0].mxu0
        %v545 = vpop.f32.mrb[0].mxu0
        %v546 = vadd.f32 0.0, %v545
        %v547 = vpop.f32.mrb[0].mxu0
        %548 = vmatprep.mubr.bf16.mxu0 0
        %549 = vmatmul.mubr.bf16.gmra.mrb[0].mxu0 %v401
        %v550 = vpop.f32.mrb[0].mxu0
        %v551 = vadd.f32 0.0, %v550
        %v552 = vpop.f32.mrb[0].mxu0
        %v553 = vpop.f32.mrb[0].mxu0
        %v554 = vadd.f32 0.0, %v553
        %v555 = vpop.f32.mrb[0].mxu0
        %556 = vmatprep.mubr.bf16.mxu0 0
        %557 = vmatmul.mubr.bf16.gmra.mrb[0].mxu0 %v402
        %v558 = vpop.f32.mrb[0].mxu0
        %v559 = vadd.f32 0.0, %v558
        %v560 = vpop.f32.mrb[0].mxu0
        %v561 = vpop.f32.mrb[0].mxu0
        %v562 = vadd.f32 0.0, %v561
        %v563 = vpop.f32.mrb[0].mxu0
        %564 = vmatprep.mubr.bf16.mxu0 0
        %565 = vmatmul.mubr.bf16.gmra.mrb[0].mxu0 %v403
        %v566 = vpop.f32.mrb[0].mxu0
        %v567 = vadd.f32 0.0, %v566
        %v568 = vpop.f32.mrb[0].mxu0
        %v569 = vpop.f32.mrb[0].mxu0
        %v570 = vadd.f32 0.0, %v569
        %v571 = vpop.f32.mrb[0].mxu0
        %572 = vmatprep.mubr.bf16.mxu0 0
        %573 = vmatmul.mubr.bf16.gmra.mrb[0].mxu0 %v404
        %v574 = vpop.f32.mrb[0].mxu0
        %v575 = vadd.f32 0.0, %v574
        %v576 = vpop.f32.mrb[0].mxu0
        %v577 = vpop.f32.mrb[0].mxu0
        %v578 = vadd.f32 0.0, %v577
        %v579 = vpop.f32.mrb[0].mxu0
        %580 = vmatprep.mubr.bf16.mxu0 0
        %581 = vmatmul.mubr.bf16.gmra.mrb[0].mxu0 %v405
        %v582 = vpop.f32.mrb[0].mxu0
        %v583 = vadd.f32 0.0, %v582
        %v584 = vpop.f32.mrb[0].mxu0
        %v585 = vpop.f32.mrb[0].mxu0
        %v586 = vadd.f32 0.0, %v585
        %v587 = vpop.f32.mrb[0].mxu0
        %588 = vmatprep.mubr.bf16.mxu0 0
        %589 = vmatmul.mubr.bf16.gmra.mrb[0].mxu0 %v406
        %v590 = vpop.f32.mrb[0].mxu0
        %v591 = vadd.f32 0.0, %v590
        %v592 = vpop.f32.mrb[0].mxu0
        %v593 = vpop.f32.mrb[0].mxu0
        %v594 = vadd.f32 0.0, %v593
        %v595 = vpop.f32.mrb[0].mxu0
        %596 = vmatprep.mubr.bf16.mxu0 0
        %597 = vmatmul.mubr.bf16.gmra.mrb[0].mxu0 %v407
        %v598 = vpop.f32.mrb[0].mxu0
        %v599 = vadd.f32 0.0, %v598
        %v600 = vpop.f32.mrb[0].mxu0
        %v601 = vpop.f32.mrb[0].mxu0
        %v602 = vadd.f32 0.0, %v601
        %v603 = vpop.f32.mrb[0].mxu0
        %604 = vmatprep.mubr.bf16.mxu0 0
        %605 = vmatmul.mubr.bf16.gmra.mrb[0].mxu0 %v408
        %v606 = vpop.f32.mrb[0].mxu0
        %v607 = vadd.f32 0.0, %v606
        %v608 = vpop.f32.mrb[0].mxu0
        %v609 = vpop.f32.mrb[0].mxu0
        %v610 = vadd.f32 0.0, %v609
        %v611 = vpop.f32.mrb[0].mxu0
        %612 = vmatprep.mubr.bf16.mxu0 0
        %613 = vmatmul.mubr.bf16.gmra.mrb[0].mxu0 %v409
        %v614 = vpop.f32.mrb[0].mxu0
        %v615 = vadd.f32 0.0, %v614
        %v616 = vpop.f32.mrb[0].mxu0
        %v617 = vpop.f32.mrb[0].mxu0
        %v618 = vadd.f32 0.0, %v617
        %v619 = vpop.f32.mrb[0].mxu0
        %620 = vmatprep.mubr.bf16.mxu0 0
        %621 = vmatmul.mubr.bf16.gmra.mrb[0].mxu0 %v410
        %v622 = vpop.f32.mrb[0].mxu0
        %v623 = vadd.f32 0.0, %v622
        %v624 = vpop.f32.mrb[0].mxu0
        %v625 = vpop.f32.mrb[0].mxu0
        %v626 = vadd.f32 0.0, %v625
        %v627 = vpop.f32.mrb[0].mxu0
        %628 = vmatprep.mubr.bf16.mxu0 0
        %629 = vmatmul.mubr.bf16.gmra.mrb[0].mxu0 %v411
        %v630 = vpop.f32.mrb[0].mxu0
        %v631 = vadd.f32 0.0, %v630
        %v632 = vpop.f32.mrb[0].mxu0
        %v633 = vpop.f32.mrb[0].mxu0
        %v634 = vadd.f32 0.0, %v633
        %v635 = vpop.f32.mrb[0].mxu0
        %636 = vdwg.mxu0
        %v637 = vadd.f32 %v284, %v511
        %v638 = vadd.f32 %v285, %v514
        %v639 = vadd.f32 %v286, %v519
        %v640 = vadd.f32 %v287, %v522
        %v641 = vadd.f32 %v288, %v527
        %v642 = vadd.f32 %v289, %v530
        %v643 = vadd.f32 %v290, %v535
        %v644 = vadd.f32 %v291, %v538
        %v645 = vadd.f32 %v292, %v543
        %v646 = vadd.f32 %v293, %v546
        %v647 = vadd.f32 %v294, %v551
        %v648 = vadd.f32 %v295, %v554
        %v649 = vadd.f32 %v296, %v559
        %v650 = vadd.f32 %v297, %v562
        %v651 = vadd.f32 %v298, %v567
        %v652 = vadd.f32 %v299, %v570
        %v653 = vadd.f32 %v300, %v575
        %v654 = vadd.f32 %v301, %v578
        %v655 = vadd.f32 %v302, %v583
        %v656 = vadd.f32 %v303, %v586
        %v657 = vadd.f32 %v304, %v591
        %v658 = vadd.f32 %v305, %v594
        %v659 = vadd.f32 %v306, %v599
        %v660 = vadd.f32 %v307, %v602
        %v661 = vadd.f32 %v308, %v607
        %v662 = vadd.f32 %v309, %v610
        %v663 = vadd.f32 %v310, %v615
        %v664 = vadd.f32 %v311, %v618
        %v665 = vadd.f32 %v312, %v623
        %v666 = vadd.f32 %v313, %v626
        %v667 = vadd.f32 %v314, %v631
        %v668 = vadd.f32 %v315, %v634
        %669 = vst [vmem:[#allocation2] sm:$0xff] %v637
        %670 = vst [vmem:[#allocation2 + $0x8] sm:$0xff] %v638
        %671 = vst [vmem:[#allocation2 + $0x10] sm:$0xff] %v639
        %672 = vst [vmem:[#allocation2 + $0x18] sm:$0xff] %v640
        %673 = vst [vmem:[#allocation2 + $0x20] sm:$0xff] %v641
        %674 = vst [vmem:[#allocation2 + $0x28] sm:$0xff] %v642
        %675 = vst [vmem:[#allocation2 + $0x30] sm:$0xff] %v643
        %676 = vst [vmem:[#allocation2 + $0x38] sm:$0xff] %v644
        %677 = vst [vmem:[#allocation2 + $0x40] sm:$0xff] %v645
        %678 = vst [vmem:[#allocation2 + $0x48] sm:$0xff] %v646
        %679 = vst [vmem:[#allocation2 + $0x50] sm:$0xff] %v647
        %680 = vst [vmem:[#allocation2 + $0x58] sm:$0xff] %v648
        %681 = vst [vmem:[#allocation2 + $0x60] sm:$0xff] %v649
        %682 = vst [vmem:[#allocation2 + $0x68] sm:$0xff] %v650
        %683 = vst [vmem:[#allocation2 + $0x70] sm:$0xff] %v651
        %684 = vst [vmem:[#allocation2 + $0x78] sm:$0xff] %v652
        %685 = vst [vmem:[#allocation2 + $0x80] sm:$0xff] %v653
        %686 = vst [vmem:[#allocation2 + $0x88] sm:$0xff] %v654
        %687 = vst [vmem:[#allocation2 + $0x90] sm:$0xff] %v655
        %688 = vst [vmem:[#allocation2 + $0x98] sm:$0xff] %v656
        %689 = vst [vmem:[#allocation2 + $0xa0] sm:$0xff] %v657
        %690 = vst [vmem:[#allocation2 + $0xa8] sm:$0xff] %v658
        %691 = vst [vmem:[#allocation2 + $0xb0] sm:$0xff] %v659
        %692 = vst [vmem:[#allocation2 + $0xb8] sm:$0xff] %v660
        %693 = vst [vmem:[#allocation2 + $0xc0] sm:$0xff] %v661
        %694 = vst [vmem:[#allocation2 + $0xc8] sm:$0xff] %v662
        %695 = vst [vmem:[#allocation2 + $0xd0] sm:$0xff] %v663
        %696 = vst [vmem:[#allocation2 + $0xd8] sm:$0xff] %v664
        %697 = vst [vmem:[#allocation2 + $0xe0] sm:$0xff] %v665
        %698 = vst [vmem:[#allocation2 + $0xe8] sm:$0xff] %v666
        %699 = vst [vmem:[#allocation2 + $0xf0] sm:$0xff] %v667
        %700 = vst [vmem:[#allocation2 + $0xf8] sm:$0xff] %v668
        // Predicated region
        $region41: #{tpu_custom_call.1} parent=27 // pred_check
          %p701 = pneg %p216
        $region42: #{tpu_custom_call.1} parent=27 // pred_check_branch
          %703 = sbr.rel (%p701) target = $region44
        $region43: #{tpu_custom_call.1} parent=27 // pred_region
          %v704 = vld [vmem:[#allocation2] sm:$0xff]
          %v705 = vld [vmem:[#allocation2 + $0x8] sm:$0xff]
          %v706 = vld [vmem:[#allocation2 + $0x10] sm:$0xff]
          %v707 = vld [vmem:[#allocation2 + $0x18] sm:$0xff]
          %v708 = vld [vmem:[#allocation2 + $0x20] sm:$0xff]
          %v709 = vld [vmem:[#allocation2 + $0x28] sm:$0xff]
          %v710 = vld [vmem:[#allocation2 + $0x30] sm:$0xff]
          %v711 = vld [vmem:[#allocation2 + $0x38] sm:$0xff]
          %v712 = vld [vmem:[#allocation2 + $0x40] sm:$0xff]
          %v713 = vld [vmem:[#allocation2 + $0x48] sm:$0xff]
          %v714 = vld [vmem:[#allocation2 + $0x50] sm:$0xff]
          %v715 = vld [vmem:[#allocation2 + $0x58] sm:$0xff]
          %v716 = vld [vmem:[#allocation2 + $0x60] sm:$0xff]
          %v717 = vld [vmem:[#allocation2 + $0x68] sm:$0xff]
          %v718 = vld [vmem:[#allocation2 + $0x70] sm:$0xff]
          %v719 = vld [vmem:[#allocation2 + $0x78] sm:$0xff]
          %v720 = vld [vmem:[#allocation2 + $0x80] sm:$0xff]
          %v721 = vld [vmem:[#allocation2 + $0x88] sm:$0xff]
          %v722 = vld [vmem:[#allocation2 + $0x90] sm:$0xff]
          %v723 = vld [vmem:[#allocation2 + $0x98] sm:$0xff]
          %v724 = vld [vmem:[#allocation2 + $0xa0] sm:$0xff]
          %v725 = vld [vmem:[#allocation2 + $0xa8] sm:$0xff]
          %v726 = vld [vmem:[#allocation2 + $0xb0] sm:$0xff]
          %v727 = vld [vmem:[#allocation2 + $0xb8] sm:$0xff]
          %v728 = vld [vmem:[#allocation2 + $0xc0] sm:$0xff]
          %v729 = vld [vmem:[#allocation2 + $0xc8] sm:$0xff]
          %v730 = vld [vmem:[#allocation2 + $0xd0] sm:$0xff]
          %v731 = vld [vmem:[#allocation2 + $0xd8] sm:$0xff]
          %v732 = vld [vmem:[#allocation2 + $0xe0] sm:$0xff]
          %v733 = vld [vmem:[#allocation2 + $0xe8] sm:$0xff]
          %v734 = vld [vmem:[#allocation2 + $0xf0] sm:$0xff]
          %v735 = vld [vmem:[#allocation2 + $0xf8] sm:$0xff]
          %v736 = vpack.c.bf16 %v705, %v704
          %v737 = vpack.c.bf16 %v707, %v706
          %v738 = vpack.c.bf16 %v709, %v708
          %v739 = vpack.c.bf16 %v711, %v710
          %v740 = vpack.c.bf16 %v713, %v712
          %v741 = vpack.c.bf16 %v715, %v714
          %v742 = vpack.c.bf16 %v717, %v716
          %v743 = vpack.c.bf16 %v719, %v718
          %v744 = vpack.c.bf16 %v721, %v720
          %v745 = vpack.c.bf16 %v723, %v722
          %v746 = vpack.c.bf16 %v725, %v724
          %v747 = vpack.c.bf16 %v727, %v726
          %v748 = vpack.c.bf16 %v729, %v728
          %v749 = vpack.c.bf16 %v731, %v730
          %v750 = vpack.c.bf16 %v733, %v732
          %v751 = vpack.c.bf16 %v735, %v734
          %v768 = vunpack.c.l.b16 %v736
          %v769 = vunpack.c.h.b16 %v736
          %v770 = vunpack.c.l.b16 %v737
          %v771 = vunpack.c.h.b16 %v737
          %v772 = vunpack.c.l.b16 %v738
          %v773 = vunpack.c.h.b16 %v738
          %v774 = vunpack.c.l.b16 %v739
          %v775 = vunpack.c.h.b16 %v739
          %v776 = vunpack.c.l.b16 %v740
          %v777 = vunpack.c.h.b16 %v740
          %v778 = vunpack.c.l.b16 %v741
          %v779 = vunpack.c.h.b16 %v741
          %v780 = vunpack.c.l.b16 %v742
          %v781 = vunpack.c.h.b16 %v742
          %v782 = vunpack.c.l.b16 %v743
          %v783 = vunpack.c.h.b16 %v743
          %v784 = vunpack.c.l.b16 %v744
          %v785 = vunpack.c.h.b16 %v744
          %v786 = vunpack.c.l.b16 %v745
          %v787 = vunpack.c.h.b16 %v745
          %v788 = vunpack.c.l.b16 %v746
          %v789 = vunpack.c.h.b16 %v746
          %v790 = vunpack.c.l.b16 %v747
          %v791 = vunpack.c.h.b16 %v747
          %v792 = vunpack.c.l.b16 %v748
          %v793 = vunpack.c.h.b16 %v748
          %v794 = vunpack.c.l.b16 %v749
          %v795 = vunpack.c.h.b16 %v749
          %v796 = vunpack.c.l.b16 %v750
          %v797 = vunpack.c.h.b16 %v750
          %v798 = vunpack.c.l.b16 %v751
          %v799 = vunpack.c.h.b16 %v751
          %v800 = vpack.c.b16 %v768, %v768
          %v801 = vpack.c.b16 %v769, %v769
          %v802 = vpack.c.b16 %v770, %v770
          %v803 = vpack.c.b16 %v771, %v771
          %v804 = vpack.c.b16 %v772, %v772
          %v805 = vpack.c.b16 %v773, %v773
          %v806 = vpack.c.b16 %v774, %v774
          %v807 = vpack.c.b16 %v775, %v775
          %v808 = vpack.c.b16 %v776, %v776
          %v809 = vpack.c.b16 %v777, %v777
          %v810 = vpack.c.b16 %v778, %v778
          %v811 = vpack.c.b16 %v779, %v779
          %v812 = vpack.c.b16 %v780, %v780
          %v813 = vpack.c.b16 %v781, %v781
          %v814 = vpack.c.b16 %v782, %v782
          %v815 = vpack.c.b16 %v783, %v783
          %v816 = vpack.c.b16 %v784, %v784
          %v817 = vpack.c.b16 %v785, %v785
          %v818 = vpack.c.b16 %v786, %v786
          %v819 = vpack.c.b16 %v787, %v787
          %v820 = vpack.c.b16 %v788, %v788
          %v821 = vpack.c.b16 %v789, %v789
          %v822 = vpack.c.b16 %v790, %v790
          %v823 = vpack.c.b16 %v791, %v791
          %v824 = vpack.c.b16 %v792, %v792
          %v825 = vpack.c.b16 %v793, %v793
          %v826 = vpack.c.b16 %v794, %v794
          %v827 = vpack.c.b16 %v795, %v795
          %v828 = vpack.c.b16 %v796, %v796
          %v829 = vpack.c.b16 %v797, %v797
          %v830 = vpack.c.b16 %v798, %v798
          %v831 = vpack.c.b16 %v799, %v799
          %864 = vst [vmem:[%s211] sm:$0xf] %v800
          %865 = vst [vmem:[%s211 + $0x4] sm:$0xf] %v801
          %866 = vst [vmem:[%s211 + $0x8] sm:$0xf] %v802
          %867 = vst [vmem:[%s211 + $0xc] sm:$0xf] %v803
          %868 = vst [vmem:[%s211 + $0x10] sm:$0xf] %v804
          %869 = vst [vmem:[%s211 + $0x14] sm:$0xf] %v805
          %870 = vst [vmem:[%s211 + $0x18] sm:$0xf] %v806
          %871 = vst [vmem:[%s211 + $0x1c] sm:$0xf] %v807
          %872 = vst [vmem:[%s211 + $0x20] sm:$0xf] %v808
          %873 = vst [vmem:[%s211 + $0x24] sm:$0xf] %v809
          %874 = vst [vmem:[%s211 + $0x28] sm:$0xf] %v810
          %875 = vst [vmem:[%s211 + $0x2c] sm:$0xf] %v811
          %876 = vst [vmem:[%s211 + $0x30] sm:$0xf] %v812
          %877 = vst [vmem:[%s211 + $0x34] sm:$0xf] %v813
          %878 = vst [vmem:[%s211 + $0x38] sm:$0xf] %v814
          %879 = vst [vmem:[%s211 + $0x3c] sm:$0xf] %v815
          %880 = vst [vmem:[%s211 + $0x40] sm:$0xf] %v816
          %881 = vst [vmem:[%s211 + $0x44] sm:$0xf] %v817
          %882 = vst [vmem:[%s211 + $0x48] sm:$0xf] %v818
          %883 = vst [vmem:[%s211 + $0x4c] sm:$0xf] %v819
          %884 = vst [vmem:[%s211 + $0x50] sm:$0xf] %v820
          %885 = vst [vmem:[%s211 + $0x54] sm:$0xf] %v821
          %886 = vst [vmem:[%s211 + $0x58] sm:$0xf] %v822
          %887 = vst [vmem:[%s211 + $0x5c] sm:$0xf] %v823
          %888 = vst [vmem:[%s211 + $0x60] sm:$0xf] %v824
          %889 = vst [vmem:[%s211 + $0x64] sm:$0xf] %v825
          %890 = vst [vmem:[%s211 + $0x68] sm:$0xf] %v826
          %891 = vst [vmem:[%s211 + $0x6c] sm:$0xf] %v827
          %892 = vst [vmem:[%s211 + $0x70] sm:$0xf] %v828
          %893 = vst [vmem:[%s211 + $0x74] sm:$0xf] %v829
          %894 = vst [vmem:[%s211 + $0x78] sm:$0xf] %v830
          %895 = vst [vmem:[%s211 + $0x7c] sm:$0xf] %v831
        $region44: #{tpu_custom_call.1} parent=27 // pred_fallthru
          _
        %s896 = sand.u32 %s105, 1
        %s897 = scalar_lea.sflag [#allocation5], %s896
        %s898 = sand.u32 %s105, 1
        %s899 = smul.addr %s898, 128
        %s900 = scalar_lea.vmem [#allocation8], %s899
        // Predicated region
        $region45: #{tpu_custom_call.1} parent=27 // pred_check
          %p901 = pneg %p115
        $region46: #{tpu_custom_call.1} parent=27 // pred_check_branch
          %903 = sbr.rel (%p901) target = $region48
        $region47: #{tpu_custom_call.1} parent=27 // pred_region
          %s904 = smul.u32 32, %s25
          %s906 = ssub.s32 2048, 2048
          %907 = vsyncadd %s897, %s906
          %s908 = sadd.s32 %s26, %s904
          %s909 = smul.addr %s908, 64
          %s910 = scalar_lea.hbm %s2, %s909
          %s911 = sshll.u32 %s900, 4
          %s912 = int_to_ptr.vmem [resolvable:$true] %s911
          %917 = dma.vmem_to_hbm [thread:$0]  %s912, 2048, %s910, %s897, 64, 64, 4
        $region48: #{tpu_custom_call.1} parent=27 // pred_fallthru
          _
      $region28: #{tpu_custom_call.1} parent=5 // pred_fallthru
        _
      %p918 = scmp.le.s32.totalorder 2, %s15
      // Predicated region
      $region49: #{tpu_custom_call.1} parent=5 // pred_check
        %p919 = pneg %p918
      $region50: #{tpu_custom_call.1} parent=5 // pred_check_branch
        %921 = sbr.rel (%p919) target = $region52
      $region51: #{tpu_custom_call.1} parent=5 // pred_region
        %s922 = ssub.s32 %s15, 2
        // Predicated region
        $region53: #{tpu_custom_call.1} parent=51 // pred_check
          %p923 = pneg %p121
        $region54: #{tpu_custom_call.1} parent=51 // pred_check_branch
          %925 = sbr.rel (%p923) target = $region56
        $region55: #{tpu_custom_call.1} parent=51 // pred_region
          %s926 = sand.u32 %s106, 1
          %s927 = scalar_lea.sflag [#allocation5], %s926
          %s928 = sand.u32 %s106, 1
          %s929 = smul.addr %s928, 128
          %s930 = scalar_lea.vmem [#allocation8], %s929
          %931 = dma.done %s927, 2048
        $region56: #{tpu_custom_call.1} parent=51 // pred_fallthru
          _
      $region52: #{tpu_custom_call.1} parent=5 // pred_fallthru
        _
    $region6: #{tpu_custom_call.1} parent=1 // loop_footer
      %s19 = sadd.s32 1, %s15
    $region7: #{tpu_custom_call.1} parent=1 // loop_footer_branch
      %14 = sbr.rel target = $region3
    $region8: #{tpu_custom_call.1} parent=1 // loop_exit
      _
    %932 = vsyncpa [#allocation4], 1
    %s933 = scalar_lea.sflag [#allocation4], 1
    %934 = vsyncpa %s933, 1
    %935 = vsyncpa [#allocation7], 1
    %936 = vsyncpa [#allocation5], 1
    %s937 = scalar_lea.sflag [#allocation5], 1
    %938 = vsyncpa %s937, 1

</llo_original>
